<compile_context>
chip_gen: v7x
topology: tpu7x:2x2x1
jax: 0.10.0
libtpu: 0.0.40
codegen_flags: <defaults>
</compile_context>

<pallas_src>
import functools

import jax
import jax.numpy as jnp
from jax.experimental import pallas as pl
from jax.experimental.pallas import tpu as pltpu

LN_EPS = 1e-5
NEG_INF = -1e9


def _layernorm(x, gamma, beta):
    mu = jnp.mean(x, axis=-1, keepdims=True)
    var = jnp.mean((x - mu) ** 2, axis=-1, keepdims=True)
    return (x - mu) * jax.lax.rsqrt(var + LN_EPS) * gamma + beta


def _bf16(x):
    return x.astype(jnp.bfloat16)


# ---------------------- kernel A: weighted layer-sum + proj ------------------

def prologue_kernel(wmix_ref, repr_ref, wp_ref, bp_ref, out_ref, *, n_in_layers):
    # wmix_ref: (NL,) f32 in SMEM; repr_ref: (NL, L, Din) f32 block for batch b.
    ws = wmix_ref[0] * repr_ref[0]
    for i in range(1, n_in_layers):                       # static, NL small
        ws = ws + wmix_ref[i] * repr_ref[i]               # leading-axis VPU adds
    out_ref[...] = (jnp.dot(_bf16(ws), wp_ref[...],
                            preferred_element_type=jnp.float32) + bp_ref[...])


# ---------------------- kernel B: stacked encoder layers ---------------------

def layer_kernel(lengths_ref,                  # SMEM (B,) int32 (scalar prefetch)
                 x0_ref,                       # (L, D) f32  projected input (per batch)
                 wqkv_ref, bqkv_ref,           # (1, D, 3D) bf16, (1, 1, 3D) f32
                 wo_ref, bo_ref,               # (1, D, D) bf16, (1, 1, D) f32
                 g1_ref, be1_ref,              # (1, 1, D) f32
                 w1_ref, b1_ref,               # (1, D, F) bf16, (1, 1, F) f32
                 w2_ref, b2_ref,               # (1, F, D) bf16, (1, 1, D) f32
                 g2_ref, be2_ref,              # (1, 1, D) f32
                 out_ref,                      # (L, D) f32 -- resident across layers
                 *, seq_len, nhead, d_model):
    b = pl.program_id(0)
    li = pl.program_id(1)
    L, H, D = seq_len, nhead, d_model
    dh = D // H

    # Seed the per-batch activation carry at the first layer.
    @pl.when(li == 0)
    def _():
        out_ref[...] = x0_ref[...]

    x = out_ref[...]                                       # (L, D) carried activation

    # Key-padding mask for this batch only: additive (1, L) over keys.
    ln = lengths_ref[b]
    col = jax.lax.broadcasted_iota(jnp.int32, (1, L), 1)
    mask = jnp.where(col < ln, 0.0, NEG_INF).astype(jnp.float32)

    # Fused QKV: one lane-dense MXU pass.
    qkv = (jnp.dot(_bf16(x), wqkv_ref[0],
                   preferred_element_type=jnp.float32) + bqkv_ref[0])   # (L, 3D)

    scale = 1.0 / float(dh) ** 0.5
    ctx_heads = []
    for h in range(H):                                     # static loop, H small
        q_h = qkv[:, h * dh:(h + 1) * dh]
        k_h = qkv[:, D + h * dh:D + (h + 1) * dh]
        v_h = qkv[:, 2 * D + h * dh:2 * D + (h + 1) * dh]
        s = jax.lax.dot_general(_bf16(q_h), _bf16(k_h),
                                (((1,), (1,)), ((), ())),
                                preferred_element_type=jnp.float32)     # (L, L)
        s = s * scale + mask
        s = s - jnp.max(s, axis=-1, keepdims=True)
        p = jnp.exp(s)
        p = p * pl.reciprocal(jnp.sum(p, axis=-1, keepdims=True), approx=True)
        ctx_heads.append(jnp.dot(_bf16(p), _bf16(v_h),
                                 preferred_element_type=jnp.float32))   # (L, dh)
    ctx = jnp.concatenate(ctx_heads, axis=-1)              # (L, D), head-major

    # Fused output projection: single (L,D)@(D,D) pass.
    attn = (jnp.dot(_bf16(ctx), wo_ref[0],
                    preferred_element_type=jnp.float32) + bo_ref[0])    # (L, D)

    h1 = _layernorm(x + attn, g1_ref[0], be1_ref[0])
    ff = jnp.dot(_bf16(h1), w1_ref[0], preferred_element_type=jnp.float32) + b1_ref[0]
    ff = jnp.maximum(ff, 0.0)
    ff = jnp.dot(_bf16(ff), w2_ref[0], preferred_element_type=jnp.float32) + b2_ref[0]
    out_ref[...] = _layernorm(h1 + ff, g2_ref[0], be2_ref[0])


# --------------------------------- wrapper -----------------------------------

def _vmem_limit_bytes(D, F, L, H):
    per_layer_w = (D * 3 * D + D * D + D * F + F * D) * 2        # bf16 matrices
    per_layer_v = (3 * D + 6 * D + F) * 4                        # biases/gammas f32
    streamed = 2 * (per_layer_w + per_layer_v)                   # double-buffered
    live = (3 * L * D + L * 3 * D + L * F + H * L * L) * 4       # carry/qkv/ffn/scores
    need = streamed + live + (2 << 20)
    # TODO(synk): re-derive the cap for v7x's 64 MiB physical VMEM.
    return int(max(16 << 20, min(need, 64 << 20)))


def downstream1_forward(params, repr_blnd, lengths):
    B, L, NL, Din = repr_blnd.shape
    D = params["proj_w"].shape[1]
    H = int(params["nhead"])
    n_layers = params["w_qkv"].shape[0]
    F = params["w1"].shape[-1]
    M = B * L

    # (B, L, NL, Din) -> (NL, B*L, Din): leading-axis layer reduce, lane-dense tiles.
    repr_nmd = jnp.transpose(repr_blnd, (2, 0, 1, 3)).reshape(NL, M, Din)
    wmix = jax.nn.softmax(params["weight_raw"]).astype(jnp.float32)
    lengths_i32 = lengths.astype(jnp.int32)

    # ---- kernel A: hoisted prologue (weighted sum + input projection) ----
    x0 = pl.pallas_call(
        functools.partial(prologue_kernel, n_in_layers=NL),
        out_shape=jax.ShapeDtypeStruct((M, D), jnp.float32),
        grid=(B,),
        in_specs=[
            pl.BlockSpec(memory_space=pltpu.MemorySpace.SMEM),    # wmix (NL,)
            pl.BlockSpec((NL, L, Din), lambda b: (0, b, 0)),      # repr, per batch
            pl.BlockSpec((Din, D), lambda b: (0, 0)),             # proj W
            pl.BlockSpec((1, D), lambda b: (0, 0)),               # proj b
        ],
        out_specs=pl.BlockSpec((L, D), lambda b: (b, 0)),
        compiler_params=pltpu.CompilerParams(dimension_semantics=("parallel",)),
    )(wmix, repr_nmd, params["proj_w"], params["proj_b"].reshape(1, D))

    # ---- kernel B: stacked encoder layers ----
    kernel = functools.partial(layer_kernel, seq_len=L, nhead=H, d_model=D)
    xb = lambda b, l, lens: (b, 0)             # per-batch activation block
    wl3 = lambda b, l, lens: (l, 0, 0)         # per-layer stacked weights

    grid_spec = pltpu.PrefetchScalarGridSpec(
        num_scalar_prefetch=1,
        grid=(B, n_layers),
        in_specs=[
            pl.BlockSpec((L, D), xb),                  # projected input x0
            pl.BlockSpec((1, D, 3 * D), wl3),          # fused QKV weight
            pl.BlockSpec((1, 1, 3 * D), wl3),          # fused QKV bias
            pl.BlockSpec((1, D, D), wl3),              # out-proj weight
            pl.BlockSpec((1, 1, D), wl3),              # out-proj bias
            pl.BlockSpec((1, 1, D), wl3),              # ln1 gamma
            pl.BlockSpec((1, 1, D), wl3),              # ln1 beta
            pl.BlockSpec((1, D, F), wl3),              # ffn W1
            pl.BlockSpec((1, 1, F), wl3),              # ffn b1
            pl.BlockSpec((1, F, D), wl3),              # ffn W2
            pl.BlockSpec((1, 1, D), wl3),              # ffn b2
            pl.BlockSpec((1, 1, D), wl3),              # ln2 gamma
            pl.BlockSpec((1, 1, D), wl3),              # ln2 beta
        ],
        out_specs=pl.BlockSpec((L, D), xb),            # revisited -> resident carry
    )

    out_flat = pl.pallas_call(
        kernel,
        out_shape=jax.ShapeDtypeStruct((M, D), jnp.float32),
        grid_spec=grid_spec,
        compiler_params=pltpu.CompilerParams(
            dimension_semantics=("parallel", "arbitrary"),
            vmem_limit_bytes=_vmem_limit_bytes(D, F, L, H)),
    )(lengths_i32, x0,
      params["w_qkv"], params["b_qkv"], params["w_o"], params["b_o"],
      params["g1"], params["be1"], params["w1"], params["b1"],
      params["w2"], params["b2"], params["g2"], params["be2"])
    return out_flat.reshape(B, L, D)


# --------------------------- parameter init & packing ------------------------

def init_params(key, *, n_in_layers, upstream_dim, d_model, nhead,
                dim_feedforward, n_layers):
    assert d_model % nhead == 0
    assert all(f == dim_feedforward[0] for f in dim_feedforward), \
        "stacked-layer kernel assumes uniform dim_feedforward"
    F = dim_feedforward[0]

    ks = iter(jax.random.split(key, 3 + 12 * n_layers))

    def dense(fan_in, fan_out):
        return jax.random.normal(next(ks), (fan_in, fan_out), jnp.float32) * 0.02

    def bias(n):
        return jax.random.normal(next(ks), (n,), jnp.float32) * 0.02

    weight_raw = jax.random.normal(next(ks), (n_in_layers,), jnp.float32)
    proj_w = dense(upstream_dim, d_model).astype(jnp.bfloat16)
    proj_b = bias(d_model)

    w_qkv, b_qkv, w_o, b_o = [], [], [], []
    g1, be1, w1, b1, w2, b2, g2, be2 = ([] for _ in range(8))
    for _ in range(n_layers):
        wq, wk, wv = (dense(d_model, d_model), dense(d_model, d_model),
                      dense(d_model, d_model))
        wo = dense(d_model, d_model)
        bq, bk, bv = bias(d_model), bias(d_model), bias(d_model)
        # Fused lane-dense QKV: x @ (D, 3D); column blocks [Wq | Wk | Wv],
        # head h occupies columns h*dh:(h+1)*dh inside each D-wide block.
        w_qkv.append(jnp.concatenate([wq, wk, wv], axis=1))
        b_qkv.append(jnp.concatenate([bq, bk, bv]).reshape(1, 3 * d_model))
        w_o.append(wo)                                   # rows = head-major concat dim
        b_o.append(bias(d_model).reshape(1, d_model))
        g1.append(jnp.ones((1, d_model), jnp.float32))
        be1.append(jnp.zeros((1, d_model), jnp.float32))
        w1.append(dense(d_model, F)); b1.append(bias(F).reshape(1, F))
        w2.append(dense(F, d_model)); b2.append(bias(d_model).reshape(1, d_model))
        g2.append(jnp.ones((1, d_model), jnp.float32))
        be2.append(jnp.zeros((1, d_model), jnp.float32))

    stack = lambda xs: jnp.stack(xs, axis=0)
    return {
        "weight_raw": weight_raw,
        "proj_w": proj_w, "proj_b": proj_b,
        "nhead": nhead,
        "w_qkv": stack(w_qkv).astype(jnp.bfloat16), "b_qkv": stack(b_qkv),
        "w_o": stack(w_o).astype(jnp.bfloat16), "b_o": stack(b_o),
        "g1": stack(g1), "be1": stack(be1),
        "w1": stack(w1).astype(jnp.bfloat16), "b1": stack(b1),
        "w2": stack(w2).astype(jnp.bfloat16), "b2": stack(b2),
        "g2": stack(g2), "be2": stack(be2),
    }


# --------------------------- pure-JAX reference (same math) ------------------

def _mm(a, b):
    return jnp.dot(_bf16(a), _bf16(b), preferred_element_type=jnp.float32)


def reference_forward(params, repr_blnd, lengths):
    B, L, NL, Din = repr_blnd.shape
    D = params["proj_w"].shape[1]
    H = int(params["nhead"])
    n_layers = params["w_qkv"].shape[0]
    dh = D // H

    w = jax.nn.softmax(params["weight_raw"]).reshape(1, 1, NL, 1)
    x = jnp.sum(repr_blnd * w, axis=2)                      # (B, L, Din)
    x = (_mm(x.reshape(B * L, Din), params["proj_w"])
         + params["proj_b"][None]).reshape(B, L, D)

    col = jnp.arange(L)[None, :]
    for li in range(n_layers):
        outs = []
        for b in range(B):
            xb = x[b]
            mask = jnp.where(col < lengths[b], 0.0, NEG_INF).astype(jnp.float32)
            qkv = _mm(xb, params["w_qkv"][li]) + params["b_qkv"][li]
            heads = []
            for h in range(H):
                q = qkv[:, h * dh:(h + 1) * dh]
                k = qkv[:, D + h * dh:D + (h + 1) * dh]
                v = qkv[:, 2 * D + h * dh:2 * D + (h + 1) * dh]
                s = _mm(q, k.T) / (dh ** 0.5) + mask
                p = jax.nn.softmax(s, axis=-1)
                heads.append(_mm(p, v))
            ctx = jnp.concatenate(heads, axis=-1)
            attn = _mm(ctx, params["w_o"][li]) + params["b_o"][li]
            h1 = _layernorm(xb + attn, params["g1"][li], params["be1"][li])
            ff = jnp.maximum(_mm(h1, params["w1"][li]) + params["b1"][li], 0.0)
            ff = _mm(ff, params["w2"][li]) + params["b2"][li]
            outs.append(_layernorm(h1 + ff, params["g2"][li], params["be2"][li]))
        x = jnp.stack(outs, axis=0)
    return x


if __name__ == "__main__":
    B, L, NL, Din = 2, 8, 4, 32            # batch, seq, n_in_layers, upstream_dim
    d_model, nhead, n_layers = 32, 2, 2
    dim_feedforward = [64, 64]

    key = jax.random.PRNGKey(0)
    k_params, k_in = jax.random.split(key)
    params = init_params(k_params, n_in_layers=NL, upstream_dim=Din,
                         d_model=d_model, nhead=nhead,
                         dim_feedforward=dim_feedforward, n_layers=n_layers)

    repr_blnd = jax.random.normal(k_in, (B, L, NL, Din), dtype=jnp.float32)
    lengths = jnp.array([8, 5], dtype=jnp.int32)

    out = downstream1_forward(params, repr_blnd, lengths)
    out = jax.block_until_ready(out)

    assert out.shape == (B, L, d_model), out.shape
    assert bool(jnp.isfinite(out).all())

    ref = reference_forward(params, repr_blnd, lengths)
    assert bool(jnp.allclose(out, ref, rtol=2e-2, atol=2e-2)), \
        float(jnp.max(jnp.abs(out - ref)))

    print("KERNEL_OK")
</pallas_src>

<mosaic_0001>
module attributes {stable_mosaic.version = 11 : i64} {
  func.func @prologue_kernel(%arg0: i32, %arg1: memref<4xf32, #tpu.memory_space<smem>>, %arg2: memref<4x8x32xf32, #tpu.memory_space<vmem>>, %arg3: memref<32x32xbf16, #tpu.memory_space<vmem>>, %arg4: memref<1x32xf32, #tpu.memory_space<vmem>>, %arg5: memref<8x32xf32, #tpu.memory_space<vmem>>) attributes {dimension_semantics = [#tpu.dimension_semantics<parallel>], iteration_bounds = array<i64: 2>, scalar_prefetch = 0 : i64, scratch_operands = 0 : i64, tpu.core_type = #tpu.core_type<tc>, window_params = [{transform_indices = @transform_0, window_bounds = array<i64: 4>}, {transform_indices = @transform_1, window_bounds = array<i64: 4, 8, 32>}, {pipeline_mode = #tpu.pipeline_mode<synchronous>, transform_indices = @transform_2, window_bounds = array<i64: 32, 32>}, {pipeline_mode = #tpu.pipeline_mode<synchronous>, transform_indices = @transform_3, window_bounds = array<i64: 1, 32>}, {transform_indices = @transform_4, window_bounds = array<i64: 8, 32>}]} {
    %c0 = arith.constant 0 : index
    %0 = memref.load %arg1[%c0] : memref<4xf32, #tpu.memory_space<smem>>
    %c0_0 = arith.constant 0 : index
    %c0_1 = arith.constant 0 : index
    %c0_2 = arith.constant 0 : index
    %1 = vector.load %arg2[%c0_0, %c0_1, %c0_2] : memref<4x8x32xf32, #tpu.memory_space<vmem>>, vector<1x8x32xf32>
    %2 = vector.shape_cast %1 : vector<1x8x32xf32> to vector<8x32xf32>
    %3 = vector.broadcast %0 : f32 to vector<8x32xf32>
    %4 = arith.mulf %3, %2 : vector<8x32xf32>
    %c1 = arith.constant 1 : index
    %5 = memref.load %arg1[%c1] : memref<4xf32, #tpu.memory_space<smem>>
    %c1_3 = arith.constant 1 : index
    %c0_4 = arith.constant 0 : index
    %c0_5 = arith.constant 0 : index
    %6 = vector.load %arg2[%c1_3, %c0_4, %c0_5] : memref<4x8x32xf32, #tpu.memory_space<vmem>>, vector<1x8x32xf32>
    %7 = vector.shape_cast %6 : vector<1x8x32xf32> to vector<8x32xf32>
    %8 = vector.broadcast %5 : f32 to vector<8x32xf32>
    %9 = arith.mulf %8, %7 : vector<8x32xf32>
    %10 = arith.addf %4, %9 : vector<8x32xf32>
    %c2 = arith.constant 2 : index
    %11 = memref.load %arg1[%c2] : memref<4xf32, #tpu.memory_space<smem>>
    %c2_6 = arith.constant 2 : index
    %c0_7 = arith.constant 0 : index
    %c0_8 = arith.constant 0 : index
    %12 = vector.load %arg2[%c2_6, %c0_7, %c0_8] : memref<4x8x32xf32, #tpu.memory_space<vmem>>, vector<1x8x32xf32>
    %13 = vector.shape_cast %12 : vector<1x8x32xf32> to vector<8x32xf32>
    %14 = vector.broadcast %11 : f32 to vector<8x32xf32>
    %15 = arith.mulf %14, %13 : vector<8x32xf32>
    %16 = arith.addf %10, %15 : vector<8x32xf32>
    %c3 = arith.constant 3 : index
    %17 = memref.load %arg1[%c3] : memref<4xf32, #tpu.memory_space<smem>>
    %c3_9 = arith.constant 3 : index
    %c0_10 = arith.constant 0 : index
    %c0_11 = arith.constant 0 : index
    %18 = vector.load %arg2[%c3_9, %c0_10, %c0_11] : memref<4x8x32xf32, #tpu.memory_space<vmem>>, vector<1x8x32xf32>
    %19 = vector.shape_cast %18 : vector<1x8x32xf32> to vector<8x32xf32>
    %20 = vector.broadcast %17 : f32 to vector<8x32xf32>
    %21 = arith.mulf %20, %19 : vector<8x32xf32>
    %22 = arith.addf %16, %21 : vector<8x32xf32>
    %23 = arith.truncf %22 : vector<8x32xf32> to vector<8x32xbf16>
    %c0_12 = arith.constant 0 : index
    %c0_13 = arith.constant 0 : index
    %24 = vector.load %arg3[%c0_12, %c0_13] : memref<32x32xbf16, #tpu.memory_space<vmem>>, vector<32x32xbf16>
    %cst = arith.constant dense<0.000000e+00> : vector<8x32xf32>
    %25 = tpu.matmul %23, %24, %cst {dimension_numbers = #tpu.dot_dimension_numbers<[1], [0], [0], [1], [0, 0, 1, 1], [], []>} : vector<8x32xbf16>, vector<32x32xbf16>, vector<8x32xf32> -> vector<8x32xf32>
    %c0_14 = arith.constant 0 : index
    %c0_15 = arith.constant 0 : index
    %26 = vector.load %arg4[%c0_14, %c0_15] : memref<1x32xf32, #tpu.memory_space<vmem>>, vector<1x32xf32>
    %27 = vector.broadcast %26 : vector<1x32xf32> to vector<8x32xf32>
    %28 = arith.addf %25, %27 : vector<8x32xf32>
    %c0_16 = arith.constant 0 : index
    %c0_17 = arith.constant 0 : index
    %29 = vector.load %arg5[%c0_16, %c0_17] : memref<8x32xf32, #tpu.memory_space<vmem>>, vector<8x32xf32>
    tpu.vector_store %arg5[%c0_16, %c0_17], %28 {strides = array<i32>} : memref<8x32xf32, #tpu.memory_space<vmem>>, vector<8x32xf32>,
    return
  }
  func.func @transform_0(%arg0: i32) -> i32 {
    %c0_i32 = arith.constant 0 : i32
    %c0_i32_0 = arith.constant 0 : i32
    return %c0_i32 : i32
  }
  func.func @transform_1(%arg0: i32) -> (i32, i32, i32) {
    %c0_i32 = arith.constant 0 : i32
    %c0_i32_0 = arith.constant 0 : i32
    %c0_i32_1 = arith.constant 0 : i32
    return %c0_i32, %arg0, %c0_i32_0 : i32, i32, i32
  }
  func.func @transform_2(%arg0: i32) -> (i32, i32) {
    %c0_i32 = arith.constant 0 : i32
    %c0_i32_0 = arith.constant 0 : i32
    %c0_i32_1 = arith.constant 0 : i32
    return %c0_i32, %c0_i32_0 : i32, i32
  }
  func.func @transform_3(%arg0: i32) -> (i32, i32) {
    %c0_i32 = arith.constant 0 : i32
    %c0_i32_0 = arith.constant 0 : i32
    %c0_i32_1 = arith.constant 0 : i32
    return %c0_i32, %c0_i32_0 : i32, i32
  }
  func.func @transform_4(%arg0: i32) -> (i32, i32) {
    %c0_i32 = arith.constant 0 : i32
    %c0_i32_0 = arith.constant 0 : i32
    return %arg0, %c0_i32 : i32, i32
  }
}

</mosaic_0001>

<llo_original>
// kernel: tpu_custom_call.1
$region0: #{tpu_custom_call.1}
  #allocation0 [shape = 'u32[]', space=smem, size = 0x4, offset = 0x4, fixed_abs, tag = 'smem constant byte address 0x4 - core index']
  #allocation1 [shape = 'u32[144,128]{1,0:T(1,128)}', space=vmem, size = 0x12000, scoped, tag = 'internal scratch']
  %s0 = inlined_call_operand.hbm [shape: f32[4], index: 0, kind: input, shape index: {}]
  %s1 = inlined_call_operand.hbm [shape: f32[4,16,32], index: 1, kind: input, shape index: {}]
  %s2 = inlined_call_operand.hbm [shape: bf16[32,32], index: 2, kind: input, shape index: {}]
  %s3 = inlined_call_operand.vmem [shape: f32[1,32], index: 3, kind: input, shape index: {}]
  %s4 = inlined_call_operand.hbm [shape: f32[16,32], index: 4, kind: output, shape index: {}]
  %s5 = sld [smem:[#allocation0]]
  $region61: #{tpu_custom_call.1} parent=0
    _
  %s7 = ssub.s32 1, %s5
  %s8 = scalar_select 0, %s7, %s5
  $region1: #{tpu_custom_call.1} parent=0
    #allocation2 [shape = 'u8[512]{0}', space=smem, size = 0x200, scoped, tag = 'input window, operand 0, single buffered']
    #allocation3 [shape = 's32[2]{0}', space=sflag, size = 0x8, scoped, tag = 'scoped memory for tpu_custom_call.1']
    #allocation4 [shape = 's32[2]{0}', space=sflag, size = 0x8, scoped, tag = 'scoped memory for tpu_custom_call.1']
    #allocation5 [shape = 's32[2]{0}', space=sflag, size = 0x8, scoped, tag = 'scoped memory for tpu_custom_call.1']
    #allocation6 [shape = 'u8[32768]{0}', space=vmem, size = 0x8000, scoped, tag = 'input window, operand 1']
    #allocation7 [shape = 'u8[8192]{0}', space=vmem, size = 0x2000, scoped, tag = 'input window, operand 2, single buffered']
    #allocation8 [shape = 's32[1]{0}', space=sflag, size = 0x4, scoped, tag = 'scoped memory for tpu_custom_call.1']
    #allocation9 [shape = 'u8[8192]{0}', space=vmem, size = 0x2000, scoped, tag = 'output window, operand 0']
    %9 = vsyncpa [#allocation5], 0
    %10 = vsyncpa [#allocation3], 0
    %s11 = scalar_lea.sflag [#allocation3], 1
    %12 = vsyncpa %s11, 0
    %13 = vsyncpa [#allocation8], 0
    %14 = vsyncpa [#allocation4], 0
    %s15 = scalar_lea.sflag [#allocation4], 1
    %16 = vsyncpa %s15, 0
    loop: start=0, step=1, limit=4
    $region2: #{tpu_custom_call.1} parent=1 // loop_pre_header
      _
    $region3: #{tpu_custom_call.1} parent=1 // loop_header
      %s18 = sphi 0, %s22
      %p19 = scmp.ge.s32.totalorder %s18, 4
      %s26 = sphi 0, %s26
      %s28 = sphi 0, %s26
      %s29 = sphi 0, %s28
      %s43 = sphi 0, %s29
      %s49 = sphi 0, %s51
      %s52 = sphi 0, %s49
      %s53 = sphi 0, %s52
      %s69 = sphi 0, %s53
      %s73 = sphi 0, %s73
      %s75 = sphi 0, %s73
      %s76 = sphi 0, %s75
      %s90 = sphi 0, %s76
      %s94 = sphi 0, %s94
      %s96 = sphi 0, %s94
      %s97 = sphi 0, %s96
      %s111 = sphi 0, %s97
      %s117 = sphi 0, %s119
      %s120 = sphi 0, %s117
      %s121 = sphi 0, %s120
      %s137 = sphi 0, %s121
    $region4: #{tpu_custom_call.1} parent=1 // loop_header_branch
      %21 = sbr.rel (%p19) target = $region8
    $region5: #{tpu_custom_call.1} parent=1 // loop_body
      %s23 = ssub.s32 %s18, 1
      %s24 = ssub.s32 %s18, 2
      %s25 = sadd.s32 %s18, 1
      %s27 = sadd.s32 %s26, 1
      %p30 = scmp.eq.s32.totalorder %s18, 1
      %p31 = scmp.ne.s32.totalorder %s26, %s28
      %p32 = scmp.eq.s32.totalorder %s18, 0
      %p33 = por %p31, %p32
      %p34 = scmp.ne.s32.totalorder %s26, %s28
      %p35 = scmp.eq.s32.totalorder %s23, 1
      %p36 = por %p34, %p35
      %p37 = scmp.ne.s32.totalorder %s28, %s29
      %p38 = scmp.eq.s32.totalorder %s23, 0
      %p39 = por %p37, %p38
      %p40 = scmp.ne.s32.totalorder %s28, %s29
      %p41 = scmp.eq.s32.totalorder %s24, 1
      %p42 = por %p40, %p41
      %p44 = scmp.ne.s32.totalorder %s29, %s43
      %p45 = scmp.eq.s32.totalorder %s24, 0
      %p46 = por %p44, %p45
      %s47 = ssub.s32 %s18, %s25
      %p48 = scmp.eq.s32.totalorder %s47, 0
      %s50 = sadd.s32 %s49, 1
      %s51 = scalar_select %p48, %s49, %s50
      %p54 = pneg %p48
      %p55 = scmp.eq.s32.totalorder %s18, 1
      %p56 = por %p54, %p55
      %p57 = scmp.ne.s32.totalorder %s49, %s52
      %p58 = scmp.eq.s32.totalorder %s18, 0
      %p59 = por %p57, %p58
      %p60 = scmp.ne.s32.totalorder %s49, %s52
      %p61 = scmp.eq.s32.totalorder %s23, 1
      %p62 = por %p60, %p61
      %p63 = scmp.ne.s32.totalorder %s52, %s53
      %p64 = scmp.eq.s32.totalorder %s23, 0
      %p65 = por %p63, %p64
      %p66 = scmp.ne.s32.totalorder %s52, %s53
      %p67 = scmp.eq.s32.totalorder %s24, 1
      %p68 = por %p66, %p67
      %p70 = scmp.ne.s32.totalorder %s53, %s69
      %p71 = scmp.eq.s32.totalorder %s24, 0
      %p72 = por %p70, %p71
      %s74 = sadd.s32 %s73, 1
      %p77 = scmp.eq.s32.totalorder %s18, 1
      %p78 = scmp.ne.s32.totalorder %s73, %s75
      %p79 = scmp.eq.s32.totalorder %s18, 0
      %p80 = por %p78, %p79
      %p81 = scmp.ne.s32.totalorder %s73, %s75
      %p82 = scmp.eq.s32.totalorder %s23, 1
      %p83 = por %p81, %p82
      %p84 = scmp.ne.s32.totalorder %s75, %s76
      %p85 = scmp.eq.s32.totalorder %s23, 0
      %p86 = por %p84, %p85
      %p87 = scmp.ne.s32.totalorder %s75, %s76
      %p88 = scmp.eq.s32.totalorder %s24, 1
      %p89 = por %p87, %p88
      %p91 = scmp.ne.s32.totalorder %s76, %s90
      %p92 = scmp.eq.s32.totalorder %s24, 0
      %p93 = por %p91, %p92
      %s95 = sadd.s32 %s94, 1
      %p98 = scmp.eq.s32.totalorder %s18, 1
      %p99 = scmp.ne.s32.totalorder %s94, %s96
      %p100 = scmp.eq.s32.totalorder %s18, 0
      %p101 = por %p99, %p100
      %p102 = scmp.ne.s32.totalorder %s94, %s96
      %p103 = scmp.eq.s32.totalorder %s23, 1
      %p104 = por %p102, %p103
      %p105 = scmp.ne.s32.totalorder %s96, %s97
      %p106 = scmp.eq.s32.totalorder %s23, 0
      %p107 = por %p105, %p106
      %p108 = scmp.ne.s32.totalorder %s96, %s97
      %p109 = scmp.eq.s32.totalorder %s24, 1
      %p110 = por %p108, %p109
      %p112 = scmp.ne.s32.totalorder %s97, %s111
      %p113 = scmp.eq.s32.totalorder %s24, 0
      %p114 = por %p112, %p113
      %s115 = ssub.s32 %s18, %s25
      %p116 = scmp.eq.s32.totalorder %s115, 0
      %s118 = sadd.s32 %s117, 1
      %s119 = scalar_select %p116, %s117, %s118
      %p122 = pneg %p116
      %p123 = scmp.eq.s32.totalorder %s18, 1
      %p124 = por %p122, %p123
      %p125 = scmp.ne.s32.totalorder %s117, %s120
      %p126 = scmp.eq.s32.totalorder %s18, 0
      %p127 = por %p125, %p126
      %p128 = scmp.ne.s32.totalorder %s117, %s120
      %p129 = scmp.eq.s32.totalorder %s23, 1
      %p130 = por %p128, %p129
      %p131 = scmp.ne.s32.totalorder %s120, %s121
      %p132 = scmp.eq.s32.totalorder %s23, 0
      %p133 = por %p131, %p132
      %p134 = scmp.ne.s32.totalorder %s120, %s121
      %p135 = scmp.eq.s32.totalorder %s24, 1
      %p136 = por %p134, %p135
      %p138 = scmp.ne.s32.totalorder %s121, %s137
      %p139 = scmp.eq.s32.totalorder %s24, 0
      %p140 = por %p138, %p139
      %p141 = scmp.le.s32.totalorder 1, %s18
      %p142 = scmp.lt.s32.totalorder %s18, 3
      %p143 = pnand %p141, %p142
      %p144 = pneg %p143
      // Predicated region
      $region9: #{tpu_custom_call.1} parent=5 // pred_check
        _
      $region10: #{tpu_custom_call.1} parent=5 // pred_check_branch
        %146 = sbr.rel (%p143) target = $region12
      $region11: #{tpu_custom_call.1} parent=5 // pred_region
        %s147 = ssub.s32 %s18, 1
        // Predicated region
        $region13: #{tpu_custom_call.1} parent=11 // pred_check
          %p148 = pneg %p39
        $region14: #{tpu_custom_call.1} parent=11 // pred_check_branch
          %150 = sbr.rel (%p148) target = $region16
        $region15: #{tpu_custom_call.1} parent=11 // pred_region
          %s152 = ssub.s32 16, 16
          %153 = vsyncadd [#allocation5], %s152
          %156 = dma.hbm_to_smem %s0, 16, [#allocation2], [#allocation5]
        $region16: #{tpu_custom_call.1} parent=11 // pred_fallthru
          _
        // Predicated region
        $region17: #{tpu_custom_call.1} parent=11 // pred_check
          %p157 = pneg %p86
        $region18: #{tpu_custom_call.1} parent=11 // pred_check_branch
          %159 = sbr.rel (%p157) target = $region20
        $region19: #{tpu_custom_call.1} parent=11 // pred_region
          %s161 = ssub.s32 256, 256
          %162 = vsyncadd [#allocation8], %s161
          %s163 = sshll.u32 [#allocation7], 4
          %s164 = int_to_ptr.vmem [resolvable:$true] %s163
          %169 = dma.hbm_to_vmem [thread:$0]  %s2, 256, %s164, [#allocation8], 64, 64, 4
        $region20: #{tpu_custom_call.1} parent=11 // pred_fallthru
          _
        // Predicated region
        $region21: #{tpu_custom_call.1} parent=11 // pred_check
          %p170 = pneg %p107
        $region22: #{tpu_custom_call.1} parent=11 // pred_check_branch
          %172 = sbr.rel (%p170) target = $region24
        $region23: #{tpu_custom_call.1} parent=11 // pred_region
          _
        $region24: #{tpu_custom_call.1} parent=11 // pred_fallthru
          _
      $region12: #{tpu_custom_call.1} parent=5 // pred_fallthru
        _
      %p173 = scmp.lt.s32.totalorder %s18, 2
      // Predicated region
      $region25: #{tpu_custom_call.1} parent=5 // pred_check
        %p174 = pneg %p173
      $region26: #{tpu_custom_call.1} parent=5 // pred_check_branch
        %176 = sbr.rel (%p174) target = $region28
      $region27: #{tpu_custom_call.1} parent=5 // pred_region
        // Predicated region
        $region29: #{tpu_custom_call.1} parent=27 // pred_check
          %p177 = pneg %p59
        $region30: #{tpu_custom_call.1} parent=27 // pred_check_branch
          %179 = sbr.rel (%p177) target = $region32
        $region31: #{tpu_custom_call.1} parent=27 // pred_region
          %s180 = sand.u32 %s49, 1
          %s181 = scalar_lea.sflag [#allocation3], %s180
          %s182 = sand.u32 %s49, 1
          %s183 = smul.addr %s182, 32
          %s184 = scalar_lea.vmem [#allocation6], %s183
          %s186 = ssub.s32 512, 512
          %187 = vsyncadd %s181, %s186
          %s188 = smul.addr %s18, 128
          %s189 = scalar_lea.hbm %s1, %s188
          %s190 = sshll.u32 %s184, 4
          %s191 = int_to_ptr.vmem [resolvable:$true] %s190
          %196 = dma.hbm_to_vmem [thread:$0]  %s189, 512, %s191, %s181, 256, 128, 8
        $region32: #{tpu_custom_call.1} parent=27 // pred_fallthru
          _
      $region28: #{tpu_custom_call.1} parent=5 // pred_fallthru
        _
      %p197 = scmp.le.s32.totalorder 1, %s18
      %p198 = scmp.lt.s32.totalorder %s18, 3
      %p199 = pnand %p197, %p198
      %p200 = pneg %p199
      // Predicated region
      $region33: #{tpu_custom_call.1} parent=5 // pred_check
        _
      $region34: #{tpu_custom_call.1} parent=5 // pred_check_branch
        %202 = sbr.rel (%p199) target = $region36
      $region35: #{tpu_custom_call.1} parent=5 // pred_region
        %s203 = ssub.s32 %s18, 1
        // Predicated region
        $region37: #{tpu_custom_call.1} parent=35 // pred_check
          %p204 = pneg %p39
        $region38: #{tpu_custom_call.1} parent=35 // pred_check_branch
          %206 = sbr.rel (%p204) target = $region40
        $region39: #{tpu_custom_call.1} parent=35 // pred_region
          %207 = dma.done [#allocation5], 16
        $region40: #{tpu_custom_call.1} parent=35 // pred_fallthru
          _
        %s208 = sand.u32 %s52, 1
        %s209 = scalar_lea.sflag [#allocation3], %s208
        %s210 = sand.u32 %s52, 1
        %s211 = smul.addr %s210, 32
        %s212 = scalar_lea.vmem [#allocation6], %s211
        // Predicated region
        $region41: #{tpu_custom_call.1} parent=35 // pred_check
          %p213 = pneg %p65
        $region42: #{tpu_custom_call.1} parent=35 // pred_check_branch
          %215 = sbr.rel (%p213) target = $region44
        $region43: #{tpu_custom_call.1} parent=35 // pred_region
          %216 = dma.done %s209, 512
        $region44: #{tpu_custom_call.1} parent=35 // pred_fallthru
          _
        // Predicated region
        $region45: #{tpu_custom_call.1} parent=35 // pred_check
          %p217 = pneg %p86
        $region46: #{tpu_custom_call.1} parent=35 // pred_check_branch
          %219 = sbr.rel (%p217) target = $region48
        $region47: #{tpu_custom_call.1} parent=35 // pred_region
          %220 = dma.done [#allocation8], 256
        $region48: #{tpu_custom_call.1} parent=35 // pred_fallthru
          _
        %221 = sfence
        %p222 = pneg %p39
        %p223 = pneg %p36
        %s224 = sand.u32 %s52, 1
        %s225 = scalar_lea.sflag [#allocation3], %s224
        %s226 = sand.u32 %s52, 1
        %s227 = smul.addr %s226, 32
        %s228 = scalar_lea.vmem [#allocation6], %s227
        %p229 = pneg %p65
        %p230 = pneg %p62
        %p231 = pneg %p86
        %p232 = pneg %p83
        %p233 = pneg %p107
        %p234 = pneg %p104
        %p235 = pneg %p133
        %p236 = pneg %p130
        %s237 = sand.u32 %s120, 1
        %s238 = scalar_lea.sflag [#allocation4], %s237
        %s239 = sand.u32 %s120, 1
        %s240 = smul.addr %s239, 8
        %s241 = scalar_lea.vmem [#allocation9], %s240
        %s243 = sld [smem:[#allocation2]]
        %v244 = vld [vmem:[%s212] sm:$0xff]
        %v245 = vstv %s243
        %v246 = vmul.f32 %v245, %v244
        %s247 = sld [smem:[#allocation2 + $0x1]]
        %s248 = scalar_lea.vmem %s212, 8 [#allocation6]
        %v249 = vld [vmem:[%s248] sm:$0xff]
        %v250 = vstv %s247
        %v251 = vmul.f32 %v250, %v249
        %v252 = vadd.f32 %v246, %v251
        %s253 = sld [smem:[#allocation2 + $0x2]]
        %s254 = scalar_lea.vmem %s212, 16 [#allocation6]
        %v255 = vld [vmem:[%s254] sm:$0xff]
        %v256 = vstv %s253
        %v257 = vmul.f32 %v256, %v255
        %v258 = vadd.f32 %v252, %v257
        %s259 = sld [smem:[#allocation2 + $0x3]]
        %s260 = scalar_lea.vmem %s212, 24 [#allocation6]
        %v261 = vld [vmem:[%s260] sm:$0xff]
        %v262 = vstv %s259
        %v263 = vmul.f32 %v262, %v261
        %v264 = vadd.f32 %v258, %v263
        %v265 = vpack.c.bf16 %v264, %v264
        %v266 = vld [vmem:[#allocation7] sm:$0xf]
        %v267 = vld [vmem:[#allocation7 + $0x4] sm:$0xf]
        %v268 = vld [vmem:[#allocation7 + $0x8] sm:$0xf]
        %v269 = vld [vmem:[#allocation7 + $0xc] sm:$0xf]
        %v270 = vld [vmem:[%s3] sm:$0x1]
        %v272 = vlaneseq
        %v273 = vshrl.u32 %v272, 7
        %v274 = vsub.s32 0, %v273
        %v275 = vrot.slane %v270, %v274
        %v281 = vunpack.c.l.b16 %v266
        %v282 = vunpack.c.l.b16 %v267
        %v283 = vunpack.c.l.b16 %v268
        %v284 = vunpack.c.l.b16 %v269
        %v285 = vpack.c.b16 %v282, %v281
        %v286 = vpack.c.b16 %v284, %v283
        %vm289 = vcmask 261120
        %v291 = vsel %vm289, %v265, 0
        %293 = vmatprep.subr.bf16.mxu0 0
        %294 = vmatpush1.bf16.msra.mxu0 %v285
        %295 = vmatprep.subr.bf16.mxu0 0
        %296 = vmatpush1.bf16.msra.mxu0 %v286
        %297 = vmatprep.subr.bf16.mxu0 0
        %298 = vmatpush1.bf16.msra.mxu0 0
        %299 = vmatprep.subr.bf16.mxu0 0
        %300 = vmatpush1.bf16.msra.mxu0 0
        %301 = vmatprep.subr.bf16.mxu0 0
        %302 = vmatpush1.bf16.msra.mxu0 0
        %303 = vmatprep.subr.bf16.mxu0 0
        %304 = vmatpush1.bf16.msra.mxu0 0
        %305 = vmatprep.subr.bf16.mxu0 0
        %306 = vmatpush1.bf16.msra.mxu0 0
        %307 = vmatprep.subr.bf16.mxu0 0
        %308 = vmatpush1.bf16.msra.mxu0 0
        %309 = vmatprep.subr.bf16.mxu0 0
        %310 = vmatpush1.bf16.msra.mxu0 0
        %311 = vmatprep.subr.bf16.mxu0 0
        %312 = vmatpush1.bf16.msra.mxu0 0
        %313 = vmatprep.subr.bf16.mxu0 0
        %314 = vmatpush1.bf16.msra.mxu0 0
        %315 = vmatprep.subr.bf16.mxu0 0
        %316 = vmatpush1.bf16.msra.mxu0 0
        %317 = vmatprep.subr.bf16.mxu0 0
        %318 = vmatpush1.bf16.msra.mxu0 0
        %319 = vmatprep.subr.bf16.mxu0 0
        %320 = vmatpush1.bf16.msra.mxu0 0
        %321 = vmatprep.subr.bf16.mxu0 0
        %322 = vmatpush1.bf16.msra.mxu0 0
        %323 = vmatprep.subr.bf16.mxu0 0
        %324 = vmatpush1.bf16.msra.mxu0 0
        %325 = vmatprep.mubr.bf16.mxu0 0
        %326 = vmatmul.mubr.bf16.gmra.mrb[0].mxu0 %v291
        %v327 = vpop.f32.mrb[0].mxu0
        %v328 = vadd.f32 %v275, %v327
        %v329 = vpop.f32.mrb[0].mxu0
        %v330 = vpop.f32.mrb[0].mxu0
        %v331 = vpop.f32.mrb[0].mxu0
        %332 = vdwg.mxu0
        %333 = vst.msk [vmem:[%s241] sm:$0xff] %vm289, %v328
        %s334 = sand.u32 %s120, 1
        %s335 = scalar_lea.sflag [#allocation4], %s334
        %s336 = sand.u32 %s120, 1
        %s337 = smul.addr %s336, 8
        %s338 = scalar_lea.vmem [#allocation9], %s337
        // Predicated region
        $region49: #{tpu_custom_call.1} parent=35 // pred_check
          %p339 = pneg %p130
        $region50: #{tpu_custom_call.1} parent=35 // pred_check_branch
          %341 = sbr.rel (%p339) target = $region52
        $region51: #{tpu_custom_call.1} parent=35 // pred_region
          %s343 = ssub.s32 128, 128
          %344 = vsyncadd %s335, %s343
          %s345 = smul.addr %s23, 128
          %s346 = scalar_lea.hbm %s4, %s345
          %s348 = sshll.u32 %s338, 4
          %s349 = int_to_ptr.vmem [resolvable:$true] %s348
          %351 = dma.vmem_to_hbm [thread:$0]  %s349, 128, %s346, %s335
        $region52: #{tpu_custom_call.1} parent=35 // pred_fallthru
          _
      $region36: #{tpu_custom_call.1} parent=5 // pred_fallthru
        _
      %p352 = scmp.le.s32.totalorder 2, %s18
      // Predicated region
      $region53: #{tpu_custom_call.1} parent=5 // pred_check
        %p353 = pneg %p352
      $region54: #{tpu_custom_call.1} parent=5 // pred_check_branch
        %355 = sbr.rel (%p353) target = $region56
      $region55: #{tpu_custom_call.1} parent=5 // pred_region
        %s356 = ssub.s32 %s18, 2
        // Predicated region
        $region57: #{tpu_custom_call.1} parent=55 // pred_check
          %p357 = pneg %p136
        $region58: #{tpu_custom_call.1} parent=55 // pred_check_branch
          %359 = sbr.rel (%p357) target = $region60
        $region59: #{tpu_custom_call.1} parent=55 // pred_region
          %s360 = sand.u32 %s121, 1
          %s361 = scalar_lea.sflag [#allocation4], %s360
          %s362 = sand.u32 %s121, 1
          %s363 = smul.addr %s362, 8
          %s364 = scalar_lea.vmem [#allocation9], %s363
          %365 = dma.done %s361, 128
        $region60: #{tpu_custom_call.1} parent=55 // pred_fallthru
          _
      $region56: #{tpu_custom_call.1} parent=5 // pred_fallthru
        _
    $region6: #{tpu_custom_call.1} parent=1 // loop_footer
      %s22 = sadd.s32 1, %s18
    $region7: #{tpu_custom_call.1} parent=1 // loop_footer_branch
      %17 = sbr.rel target = $region3
    $region8: #{tpu_custom_call.1} parent=1 // loop_exit
      _
    %366 = vsyncpa [#allocation3], 1
    %s367 = scalar_lea.sflag [#allocation3], 1
    %368 = vsyncpa %s367, 1
    %369 = vsyncpa [#allocation8], 1
    %370 = vsyncpa [#allocation4], 1
    %s371 = scalar_lea.sflag [#allocation4], 1
    %372 = vsyncpa %s371, 1
    %373 = vsyncpa [#allocation5], 1
    %s374 = scalar_lea.sflag [#allocation5], 1
    %375 = vsyncpa %s374, 1

</llo_original>
